<compile_context>
chip_gen: v7x
topology: tpu7x:2x2x1
jax: 0.10.0
libtpu: 0.0.40
codegen_flags: <defaults>
</compile_context>

<pallas_src>
from functools import partial

import jax
import jax.numpy as jnp
from jax import lax
from jax.experimental import pallas as pl
from jax.experimental.pallas import tpu as pltpu  # noqa: F401  (kept for the TODO scaling path)


def attention_kernel(img_ref, ques_ref, wv_ref, wq_ref, bq_ref, wx_ref, bx_ref, out_ref):
    # img_ref : (N, Cv, HW)   ques_ref: (N, Cq)
    # wv_ref  : (M, Cv)       wq_ref  : (M, Cq)     bq_ref: (M, 1)
    # wx_ref  : (G, M)        bx_ref  : (G, 1)
    # out_ref : (N, G, HW)
    n_batch = img_ref.shape[0]

    # Fused question projection: q = wq @ ques.T + bq  -> (M, N), one column per batch.
    # Contract the Cq axis of both operands (rhs-transposed matmul, MXU).
    q_all = lax.dot_general(
        wq_ref[...], ques_ref[...],
        dimension_numbers=(((1,), (1,)), ((), ())),
        preferred_element_type=jnp.float32,
    ) + bq_ref[...]                                                       # (M, N) f32

    wv = wv_ref[...]
    wx = wx_ref[...]
    bx = bx_ref[...]

    # N is tiny and static -> unrolled; each iteration is two lane-dense MXU matmuls.
    for n in range(n_batch):
        imgn = img_ref[n]                                                 # (Cv, HW)

        # v_conv (1x1 conv, no bias): weights-as-LHS matmul over channels.
        v = jnp.dot(wv, imgn, preferred_element_type=jnp.float32)        # (M, HW) f32

        # tile_2d_over_nd + add + ReLU: broadcast the per-batch (M, 1) column over HW.
        x = jnp.maximum(v + q_all[:, n:n + 1], 0.0)                       # (M, HW) f32

        # x_conv (1x1 conv with bias); cast activations to the weight dtype for the MXU.
        x = x.astype(wx.dtype)
        out = jnp.dot(wx, x, preferred_element_type=jnp.float32) + bx     # (G, HW) f32

        out_ref[n] = out.astype(out_ref.dtype)


@partial(jax.jit, static_argnames=("use_bf16",))
def attention_forward(img_nchw, ques, wv, wq, bq, wx, bx, *, use_bf16=False):
    """Forward pass of the Attention module.

    img_nchw: (N, Cv, H, W) float32
    ques    : (N, Cq)       float32
    wv: (M, Cv)  -- v_conv weight in PyTorch layout (out, in), 1x1 kernel squeezed
    wq: (M, Cq)  -- q_lin weight in PyTorch layout (out, in)
    bq: (M,)
    wx: (G, M)   -- x_conv weight in PyTorch layout (out, in)
    bx: (G,)
    returns (N, G, H, W) float32
    """
    N, Cv, H, W = img_nchw.shape
    M, Cq = wq.shape
    G = wx.shape[0]
    HW = H * W

    # Pure reshape (channels-first preserved) -- no transpose, no HBM shuffle.
    img = img_nchw.reshape(N, Cv, HW)
    bq2 = bq.reshape(M, 1)
    bx2 = bx.reshape(G, 1)

    if use_bf16:
        # Halve the dominant HBM bytes (img) and double MXU throughput; accumulation
        # stays f32 in-kernel, add/ReLU stay f32.
        img = img.astype(jnp.bfloat16)
        wv_k = wv.astype(jnp.bfloat16)
        wx_k = wx.astype(jnp.bfloat16)
    else:
        wv_k, wx_k = wv, wx

    # Advisory cost estimate so XLA schedules this tiny custom call correctly.
    flops = 2 * N * HW * (M * Cv + G * M) + 2 * N * M * Cq
    bytes_accessed = (
        img.size * img.dtype.itemsize
        + ques.size * ques.dtype.itemsize
        + wv_k.size * wv_k.dtype.itemsize
        + wq.size * wq.dtype.itemsize
        + bq2.size * bq2.dtype.itemsize
        + wx_k.size * wx_k.dtype.itemsize
        + bx2.size * bx2.dtype.itemsize
        + N * G * HW * 4
    )
    cost = pl.CostEstimate(flops=flops, transcendentals=0, bytes_accessed=bytes_accessed)

    # Single invocation, no grid: every operand (~64 KiB total here) is one whole
    # VMEM block; no per-step pipeline overhead, no repeated weight DMA.
    out = pl.pallas_call(
        attention_kernel,
        out_shape=jax.ShapeDtypeStruct((N, G, HW), jnp.float32),
        cost_estimate=cost,
    )(img, ques, wv_k, wq, bq2, wx_k, bx2)

    # Pure reshape back to NCHW -- no transpose needed.
    return out.reshape(N, G, H, W)


def reference_forward(img_nchw, ques, wv, wq, bq, wx, bx):
    """Pure-JAX reference matching the PyTorch forward semantics."""
    imgf = jnp.transpose(img_nchw, (0, 2, 3, 1))                 # (N, H, W, Cv)
    v = jnp.einsum("nhwc,mc->nhwm", imgf, wv)                    # v_conv
    q = ques @ wq.T + bq                                         # q_lin  (N, M)
    x = jnp.maximum(v + q[:, None, None, :], 0.0)                # tile + add + relu
    o = jnp.einsum("nhwm,gm->nhwg", x, wx) + bx                  # x_conv
    return jnp.transpose(o, (0, 3, 1, 2))                        # (N, G, H, W)


if __name__ == "__main__":
    # Module hyperparameters (small, consistent with __init__ signature).
    v_features, q_features, mid_features, glimpses = 32, 16, 32, 4
    N, H, W = 2, 16, 16   # HW = 256 -> lane-dense output stores

    key = jax.random.PRNGKey(0)
    k_img, k_q, k_wv, k_wq, k_bq, k_wx, k_bx = jax.random.split(key, 7)

    img = jax.random.normal(k_img, (N, v_features, H, W), dtype=jnp.float32)
    ques = jax.random.normal(k_q, (N, q_features), dtype=jnp.float32)

    # Parameters kept in PyTorch-native (out, in) layout (1x1 conv kernels squeezed).
    wv = 0.1 * jax.random.normal(k_wv, (mid_features, v_features), dtype=jnp.float32)
    wq = 0.1 * jax.random.normal(k_wq, (mid_features, q_features), dtype=jnp.float32)
    bq = 0.1 * jax.random.normal(k_bq, (mid_features,), dtype=jnp.float32)
    wx = 0.1 * jax.random.normal(k_wx, (glimpses, mid_features), dtype=jnp.float32)
    bx = 0.1 * jax.random.normal(k_bx, (glimpses,), dtype=jnp.float32)

    ref = reference_forward(img, ques, wv, wq, bq, wx, bx)

    # f32 path (default): tight check against the pure-JAX reference.
    out = jax.block_until_ready(attention_forward(img, ques, wv, wq, bq, wx, bx))
    assert out.shape == (N, glimpses, H, W)
    assert jnp.allclose(out, ref, atol=1e-4, rtol=1e-4), "f32 mismatch vs reference"

    # bf16 matmul-input path (recommended once HW scales / kernel becomes HBM-bound);
    # accumulation stays f32, so only a modestly loosened tolerance is needed.
    out_bf16 = jax.block_until_ready(
        attention_forward(img, ques, wv, wq, bq, wx, bx, use_bf16=True))
    assert out_bf16.shape == (N, glimpses, H, W)
    assert jnp.allclose(out_bf16, ref, atol=3e-2, rtol=3e-2), "bf16 mismatch vs reference"

    print("KERNEL_OK")
</pallas_src>

<mosaic_0001>
module attributes {stable_mosaic.version = 11 : i64} {
  func.func @attention_kernel(%arg0: memref<2x32x256xf32, #tpu.memory_space<vmem>>, %arg1: memref<2x16xf32, #tpu.memory_space<vmem>>, %arg2: memref<32x32xf32, #tpu.memory_space<vmem>>, %arg3: memref<32x16xf32, #tpu.memory_space<vmem>>, %arg4: memref<32x1xf32, #tpu.memory_space<vmem>>, %arg5: memref<4x32xf32, #tpu.memory_space<vmem>>, %arg6: memref<4x1xf32, #tpu.memory_space<vmem>>, %arg7: memref<2x4x256xf32, #tpu.memory_space<vmem>>) attributes {dimension_semantics = [], scalar_prefetch = 0 : i64, scratch_operands = 0 : i64, tpu.core_type = #tpu.core_type<tc>} {
    %c0 = arith.constant 0 : index
    %c0_0 = arith.constant 0 : index
    %0 = vector.load %arg3[%c0, %c0_0] : memref<32x16xf32, #tpu.memory_space<vmem>>, vector<32x16xf32>
    %c0_1 = arith.constant 0 : index
    %c0_2 = arith.constant 0 : index
    %1 = vector.load %arg1[%c0_1, %c0_2] : memref<2x16xf32, #tpu.memory_space<vmem>>, vector<2x16xf32>
    %cst = arith.constant dense<0.000000e+00> : vector<32x2xf32>
    %2 = tpu.matmul %0, %1, %cst {dimension_numbers = #tpu.dot_dimension_numbers<[1], [1], [0], [0], [0, 0, 1, 0], [], []>} : vector<32x16xf32>, vector<2x16xf32>, vector<32x2xf32> -> vector<32x2xf32>
    %c0_3 = arith.constant 0 : index
    %c0_4 = arith.constant 0 : index
    %3 = vector.load %arg4[%c0_3, %c0_4] : memref<32x1xf32, #tpu.memory_space<vmem>>, vector<32x1xf32>
    %4 = vector.broadcast %3 : vector<32x1xf32> to vector<32x2xf32>
    %5 = arith.addf %2, %4 : vector<32x2xf32>
    %c0_5 = arith.constant 0 : index
    %c0_6 = arith.constant 0 : index
    %6 = vector.load %arg2[%c0_5, %c0_6] : memref<32x32xf32, #tpu.memory_space<vmem>>, vector<32x32xf32>
    %c0_7 = arith.constant 0 : index
    %c0_8 = arith.constant 0 : index
    %7 = vector.load %arg5[%c0_7, %c0_8] : memref<4x32xf32, #tpu.memory_space<vmem>>, vector<4x32xf32>
    %c0_9 = arith.constant 0 : index
    %c0_10 = arith.constant 0 : index
    %8 = vector.load %arg6[%c0_9, %c0_10] : memref<4x1xf32, #tpu.memory_space<vmem>>, vector<4x1xf32>
    %c0_11 = arith.constant 0 : index
    %c0_12 = arith.constant 0 : index
    %c0_13 = arith.constant 0 : index
    %9 = vector.load %arg0[%c0_11, %c0_12, %c0_13] : memref<2x32x256xf32, #tpu.memory_space<vmem>>, vector<1x32x256xf32>
    %10 = vector.shape_cast %9 : vector<1x32x256xf32> to vector<32x256xf32>
    %cst_14 = arith.constant dense<0.000000e+00> : vector<32x256xf32>
    %11 = tpu.matmul %6, %10, %cst_14 {dimension_numbers = #tpu.dot_dimension_numbers<[1], [0], [0], [1], [0, 0, 1, 1], [], []>} : vector<32x32xf32>, vector<32x256xf32>, vector<32x256xf32> -> vector<32x256xf32>
    %12 = vector.extract_strided_slice %5 {offsets = [0, 0], sizes = [32, 1], strides = [1, 1]} : vector<32x2xf32> to vector<32x1xf32>
    %13 = vector.broadcast %12 : vector<32x1xf32> to vector<32x256xf32>
    %14 = arith.addf %11, %13 : vector<32x256xf32>
    %cst_15 = arith.constant 0.000000e+00 : f32
    %15 = vector.broadcast %cst_15 : f32 to vector<32x256xf32>
    %16 = arith.maximumf %14, %15 : vector<32x256xf32>
    %cst_16 = arith.constant dense<0.000000e+00> : vector<4x256xf32>
    %17 = tpu.matmul %7, %16, %cst_16 {dimension_numbers = #tpu.dot_dimension_numbers<[1], [0], [0], [1], [0, 0, 1, 1], [], []>} : vector<4x32xf32>, vector<32x256xf32>, vector<4x256xf32> -> vector<4x256xf32>
    %18 = vector.broadcast %8 : vector<4x1xf32> to vector<4x256xf32>
    %19 = arith.addf %17, %18 : vector<4x256xf32>
    %c0_17 = arith.constant 0 : index
    %c0_18 = arith.constant 0 : index
    %c0_19 = arith.constant 0 : index
    %20 = vector.load %arg7[%c0_17, %c0_18, %c0_19] : memref<2x4x256xf32, #tpu.memory_space<vmem>>, vector<1x4x256xf32>
    %21 = vector.shape_cast %20 : vector<1x4x256xf32> to vector<4x256xf32>
    %22 = vector.shape_cast %19 : vector<4x256xf32> to vector<1x4x256xf32>
    tpu.vector_store %arg7[%c0_17, %c0_18, %c0_19], %22 {strides = array<i32>} : memref<2x4x256xf32, #tpu.memory_space<vmem>>, vector<1x4x256xf32>,
    %c1 = arith.constant 1 : index
    %c0_20 = arith.constant 0 : index
    %c0_21 = arith.constant 0 : index
    %23 = vector.load %arg0[%c1, %c0_20, %c0_21] : memref<2x32x256xf32, #tpu.memory_space<vmem>>, vector<1x32x256xf32>
    %24 = vector.shape_cast %23 : vector<1x32x256xf32> to vector<32x256xf32>
    %cst_22 = arith.constant dense<0.000000e+00> : vector<32x256xf32>
    %25 = tpu.matmul %6, %24, %cst_22 {dimension_numbers = #tpu.dot_dimension_numbers<[1], [0], [0], [1], [0, 0, 1, 1], [], []>} : vector<32x32xf32>, vector<32x256xf32>, vector<32x256xf32> -> vector<32x256xf32>
    %26 = vector.extract_strided_slice %5 {offsets = [0, 1], sizes = [32, 1], strides = [1, 1]} : vector<32x2xf32> to vector<32x1xf32>
    %27 = vector.broadcast %26 : vector<32x1xf32> to vector<32x256xf32>
    %28 = arith.addf %25, %27 : vector<32x256xf32>
    %cst_23 = arith.constant 0.000000e+00 : f32
    %29 = vector.broadcast %cst_23 : f32 to vector<32x256xf32>
    %30 = arith.maximumf %28, %29 : vector<32x256xf32>
    %cst_24 = arith.constant dense<0.000000e+00> : vector<4x256xf32>
    %31 = tpu.matmul %7, %30, %cst_24 {dimension_numbers = #tpu.dot_dimension_numbers<[1], [0], [0], [1], [0, 0, 1, 1], [], []>} : vector<4x32xf32>, vector<32x256xf32>, vector<4x256xf32> -> vector<4x256xf32>
    %32 = vector.broadcast %8 : vector<4x1xf32> to vector<4x256xf32>
    %33 = arith.addf %31, %32 : vector<4x256xf32>
    %c1_25 = arith.constant 1 : index
    %c0_26 = arith.constant 0 : index
    %c0_27 = arith.constant 0 : index
    %34 = vector.load %arg7[%c1_25, %c0_26, %c0_27] : memref<2x4x256xf32, #tpu.memory_space<vmem>>, vector<1x4x256xf32>
    %35 = vector.shape_cast %34 : vector<1x4x256xf32> to vector<4x256xf32>
    %36 = vector.shape_cast %33 : vector<4x256xf32> to vector<1x4x256xf32>
    tpu.vector_store %arg7[%c1_25, %c0_26, %c0_27], %36 {strides = array<i32>} : memref<2x4x256xf32, #tpu.memory_space<vmem>>, vector<1x4x256xf32>,
    return
  }
}

</mosaic_0001>

<llo_original>
// kernel: attention_forward.1
$region0: #{attention_forward.1}
  #allocation0 [shape = 'u32[]', space=smem, size = 0x4, offset = 0x4, fixed_abs, tag = 'smem constant byte address 0x4 - core index']
  #allocation1 [shape = 'u32[144,128]{1,0:T(1,128)}', space=vmem, size = 0x12000, scoped, tag = 'internal scratch']
  %s0 = inlined_call_operand.vmem [shape: f32[2,32,256], index: 0, kind: input, shape index: {}]
  %s1 = inlined_call_operand.vmem [shape: f32[2,16], index: 1, kind: input, shape index: {}]
  %s2 = inlined_call_operand.vmem [shape: f32[32,32], index: 2, kind: input, shape index: {}]
  %s3 = inlined_call_operand.vmem [shape: f32[32,16], index: 3, kind: input, shape index: {}]
  %s4 = inlined_call_operand.vmem [shape: f32[32,1], index: 4, kind: input, shape index: {}]
  %s5 = inlined_call_operand.vmem [shape: f32[4,32], index: 5, kind: input, shape index: {}]
  %s6 = inlined_call_operand.vmem [shape: f32[4,1], index: 6, kind: input, shape index: {}]
  %s7 = inlined_call_operand.vmem [shape: f32[2,4,256], index: 7, kind: output, shape index: {}]
  %s8 = sld [smem:[#allocation0]]
  $region38: #{attention_forward.1} parent=0
    _
  %s10 = ssub.s32 1, %s8
  %s11 = scalar_select 0, %s10, %s8
  // Predicated region
  $region2: #{attention_forward.1} parent=0 // pred_check
    _
  $region3: #{attention_forward.1} parent=0 // pred_check_branch
    %13 = sbr.rel (0) target = $region5
  $region4: #{attention_forward.1} parent=0 // pred_region
    _
  $region5: #{attention_forward.1} parent=0 // pred_fallthru
    _
  // Predicated region
  $region6: #{attention_forward.1} parent=0 // pred_check
    _
  $region7: #{attention_forward.1} parent=0 // pred_check_branch
    %15 = sbr.rel (0) target = $region9
  $region8: #{attention_forward.1} parent=0 // pred_region
    _
  $region9: #{attention_forward.1} parent=0 // pred_fallthru
    _
  // Predicated region
  $region10: #{attention_forward.1} parent=0 // pred_check
    _
  $region11: #{attention_forward.1} parent=0 // pred_check_branch
    %17 = sbr.rel (0) target = $region13
  $region12: #{attention_forward.1} parent=0 // pred_region
    _
  $region13: #{attention_forward.1} parent=0 // pred_fallthru
    _
  // Predicated region
  $region14: #{attention_forward.1} parent=0 // pred_check
    _
  $region15: #{attention_forward.1} parent=0 // pred_check_branch
    %19 = sbr.rel (0) target = $region17
  $region16: #{attention_forward.1} parent=0 // pred_region
    _
  $region17: #{attention_forward.1} parent=0 // pred_fallthru
    _
  // Predicated region
  $region18: #{attention_forward.1} parent=0 // pred_check
    _
  $region19: #{attention_forward.1} parent=0 // pred_check_branch
    %21 = sbr.rel (0) target = $region21
  $region20: #{attention_forward.1} parent=0 // pred_region
    _
  $region21: #{attention_forward.1} parent=0 // pred_fallthru
    _
  // Predicated region
  $region22: #{attention_forward.1} parent=0 // pred_check
    _
  $region23: #{attention_forward.1} parent=0 // pred_check_branch
    %23 = sbr.rel (0) target = $region25
  $region24: #{attention_forward.1} parent=0 // pred_region
    _
  $region25: #{attention_forward.1} parent=0 // pred_fallthru
    _
  // Predicated region
  $region26: #{attention_forward.1} parent=0 // pred_check
    _
  $region27: #{attention_forward.1} parent=0 // pred_check_branch
    %25 = sbr.rel (0) target = $region29
  $region28: #{attention_forward.1} parent=0 // pred_region
    _
  $region29: #{attention_forward.1} parent=0 // pred_fallthru
    _
  %v26 = vld [vmem:[%s3] sm:$0xff]
  %v27 = vld [vmem:[%s3 + $0x8] sm:$0xff]
  %v28 = vld [vmem:[%s3 + $0x10] sm:$0xff]
  %v29 = vld [vmem:[%s3 + $0x18] sm:$0xff]
  %v30 = vld [vmem:[%s1] sm:$0x3]
  %v31 = vld [vmem:[%s4] sm:$0xff]
  %v32 = vld [vmem:[%s4 + $0x8] sm:$0xff]
  %v33 = vld [vmem:[%s4 + $0x10] sm:$0xff]
  %v34 = vld [vmem:[%s4 + $0x18] sm:$0xff]
  %36 = vset.pattern.permute.xlu0 0
  %37 = vperm.xlu0 %36, %v31
  %v38 = vpop.permute.xlu0 %37
  %41 = vset.pattern.permute.xlu0 0
  %42 = vperm.xlu0 %41, %v32
  %v43 = vpop.permute.xlu0 %42
  %46 = vset.pattern.permute.xlu0 0
  %47 = vperm.xlu0 %46, %v33
  %v48 = vpop.permute.xlu0 %47
  %51 = vset.pattern.permute.xlu0 0
  %52 = vperm.xlu0 %51, %v34
  %v53 = vpop.permute.xlu0 %52
  %vm55 = vcmask 130048
  %v57 = vsel %vm55, %v26, 0
  %v60 = vsel %vm55, %v27, 0
  %v63 = vsel %vm55, %v28, 0
  %v66 = vsel %vm55, %v29, 0
  %v69 = vsel %vm55, %v30, 0
  %71 = vmatprep.subr.mxu0 0.0
  %72 = vmatpush1.xpose.msra.mxu0 %v69
  %73 = vmatprep.subr.mxu0 0.0
  %74 = vmatpush1.xpose.msra.mxu0 0.0
  %75 = vmatprep.subr.mxu0 0.0
  %76 = vmatpush1.xpose.msra.mxu0 0.0
  %77 = vmatprep.subr.mxu0 0.0
  %78 = vmatpush1.xpose.msra.mxu0 0.0
  %79 = vmatprep.subr.mxu0 0.0
  %80 = vmatpush1.xpose.msra.mxu0 0.0
  %81 = vmatprep.subr.mxu0 0.0
  %82 = vmatpush1.xpose.msra.mxu0 0.0
  %83 = vmatprep.subr.mxu0 0.0
  %84 = vmatpush1.xpose.msra.mxu0 0.0
  %85 = vmatprep.subr.mxu0 0.0
  %86 = vmatpush1.xpose.msra.mxu0 0.0
  %87 = vmatprep.subr.mxu0 0.0
  %88 = vmatpush1.xpose.msra.mxu0 0.0
  %89 = vmatprep.subr.mxu0 0.0
  %90 = vmatpush1.xpose.msra.mxu0 0.0
  %91 = vmatprep.subr.mxu0 0.0
  %92 = vmatpush1.xpose.msra.mxu0 0.0
  %93 = vmatprep.subr.mxu0 0.0
  %94 = vmatpush1.xpose.msra.mxu0 0.0
  %95 = vmatprep.subr.mxu0 0.0
  %96 = vmatpush1.xpose.msra.mxu0 0.0
  %97 = vmatprep.subr.mxu0 0.0
  %98 = vmatpush1.xpose.msra.mxu0 0.0
  %99 = vmatprep.subr.mxu0 0.0
  %100 = vmatpush1.xpose.msra.mxu0 0.0
  %101 = vmatprep.subr.mxu0 0.0
  %102 = vmatpush1.xpose.msra.mxu0 0.0
  %103 = vmatprep.subr.mxu0 0.0
  %104 = vmatpush1.xpose.msra.mxu0 0.0
  %105 = vmatprep.subr.mxu0 0.0
  %106 = vmatpush1.xpose.msra.mxu0 0.0
  %107 = vmatprep.subr.mxu0 0.0
  %108 = vmatpush1.xpose.msra.mxu0 0.0
  %109 = vmatprep.subr.mxu0 0.0
  %110 = vmatpush1.xpose.msra.mxu0 0.0
  %111 = vmatprep.subr.mxu0 0.0
  %112 = vmatpush1.xpose.msra.mxu0 0.0
  %113 = vmatprep.subr.mxu0 0.0
  %114 = vmatpush1.xpose.msra.mxu0 0.0
  %115 = vmatprep.subr.mxu0 0.0
  %116 = vmatpush1.xpose.msra.mxu0 0.0
  %117 = vmatprep.subr.mxu0 0.0
  %118 = vmatpush1.xpose.msra.mxu0 0.0
  %119 = vmatprep.subr.mxu0 0.0
  %120 = vmatpush1.xpose.msra.mxu0 0.0
  %121 = vmatprep.subr.mxu0 0.0
  %122 = vmatpush1.xpose.msra.mxu0 0.0
  %123 = vmatprep.subr.mxu0 0.0
  %124 = vmatpush1.xpose.msra.mxu0 0.0
  %125 = vmatprep.subr.mxu0 0.0
  %126 = vmatpush1.xpose.msra.mxu0 0.0
  %127 = vmatprep.subr.mxu0 0.0
  %128 = vmatpush1.xpose.msra.mxu0 0.0
  %129 = vmatprep.subr.mxu0 0.0
  %130 = vmatpush1.xpose.msra.mxu0 0.0
  %131 = vmatprep.subr.mxu0 0.0
  %132 = vmatpush1.xpose.msra.mxu0 0.0
  %133 = vmatprep.subr.mxu0 0.0
  %134 = vmatpush1.xpose.msra.mxu0 0.0
  %135 = vmatprep.mubr.f32.mxu0 0.0
  %136 = vmatmul.mubr.f32.gmra.mrb[0].mxu0 %v57
  %v137 = vpop.f32.mrb[0].mxu0
  %v138 = vadd.f32 %v38, %v137
  %v139 = vpop.f32.mrb[0].mxu0
  %140 = vmatprep.mubr.f32.mxu0 0.0
  %141 = vmatmul.mubr.f32.gmra.mrb[0].mxu0 %v60
  %v142 = vpop.f32.mrb[0].mxu0
  %v143 = vadd.f32 %v43, %v142
  %v144 = vpop.f32.mrb[0].mxu0
  %145 = vmatprep.mubr.f32.mxu0 0.0
  %146 = vmatmul.mubr.f32.gmra.mrb[0].mxu0 %v63
  %v147 = vpop.f32.mrb[0].mxu0
  %v148 = vadd.f32 %v48, %v147
  %v149 = vpop.f32.mrb[0].mxu0
  %150 = vmatprep.mubr.f32.mxu0 0.0
  %151 = vmatmul.mubr.f32.gmra.mrb[0].mxu0 %v66
  %v152 = vpop.f32.mrb[0].mxu0
  %v153 = vadd.f32 %v53, %v152
  %v154 = vpop.f32.mrb[0].mxu0
  %155 = vdwg.mxu0
  %v156 = vld [vmem:[%s2] sm:$0xff]
  %v157 = vld [vmem:[%s2 + $0x8] sm:$0xff]
  %v158 = vld [vmem:[%s2 + $0x10] sm:$0xff]
  %v159 = vld [vmem:[%s2 + $0x18] sm:$0xff]
  %v160 = vld [vmem:[%s5] sm:$0xf]
  %v161 = vld [vmem:[%s6] sm:$0xf]
  %v162 = vld [vmem:[%s0] sm:$0xff]
  %v163 = vld [vmem:[%s0 + $0x8] sm:$0xff]
  %v164 = vld [vmem:[%s0 + $0x10] sm:$0xff]
  %v165 = vld [vmem:[%s0 + $0x18] sm:$0xff]
  %v166 = vld [vmem:[%s0 + $0x20] sm:$0xff]
  %v167 = vld [vmem:[%s0 + $0x28] sm:$0xff]
  %v168 = vld [vmem:[%s0 + $0x30] sm:$0xff]
  %v169 = vld [vmem:[%s0 + $0x38] sm:$0xff]
  %171 = vset.pattern.permute.xlu0 0
  %172 = vperm.xlu0 %171, %v138
  %v173 = vpop.permute.xlu0 %172
  %176 = vset.pattern.permute.xlu0 0
  %177 = vperm.xlu0 %176, %v143
  %v178 = vpop.permute.xlu0 %177
  %181 = vset.pattern.permute.xlu0 0
  %182 = vperm.xlu0 %181, %v148
  %v183 = vpop.permute.xlu0 %182
  %186 = vset.pattern.permute.xlu0 0
  %187 = vperm.xlu0 %186, %v153
  %v188 = vpop.permute.xlu0 %187
  %vm190 = vcmask 261120
  %v192 = vsel %vm190, %v156, 0
  %v195 = vsel %vm190, %v157, 0
  %v198 = vsel %vm190, %v158, 0
  %v201 = vsel %vm190, %v159, 0
  %203 = vmatprep.subr.mxu0 %v163
  %204 = vmatpush1.msra.mxu0 %v162
  %205 = vmatprep.subr.mxu0 %v165
  %206 = vmatpush1.msra.mxu0 %v164
  %207 = vmatprep.subr.mxu0 %v167
  %208 = vmatpush1.msra.mxu0 %v166
  %209 = vmatprep.subr.mxu0 %v169
  %210 = vmatpush1.msra.mxu0 %v168
  %211 = vmatprep.subr.mxu0 0.0
  %212 = vmatpush1.msra.mxu0 0.0
  %213 = vmatprep.subr.mxu0 0.0
  %214 = vmatpush1.msra.mxu0 0.0
  %215 = vmatprep.subr.mxu0 0.0
  %216 = vmatpush1.msra.mxu0 0.0
  %217 = vmatprep.subr.mxu0 0.0
  %218 = vmatpush1.msra.mxu0 0.0
  %219 = vmatprep.subr.mxu0 0.0
  %220 = vmatpush1.msra.mxu0 0.0
  %221 = vmatprep.subr.mxu0 0.0
  %222 = vmatpush1.msra.mxu0 0.0
  %223 = vmatprep.subr.mxu0 0.0
  %224 = vmatpush1.msra.mxu0 0.0
  %225 = vmatprep.subr.mxu0 0.0
  %226 = vmatpush1.msra.mxu0 0.0
  %227 = vmatprep.subr.mxu0 0.0
  %228 = vmatpush1.msra.mxu0 0.0
  %229 = vmatprep.subr.mxu0 0.0
  %230 = vmatpush1.msra.mxu0 0.0
  %231 = vmatprep.subr.mxu0 0.0
  %232 = vmatpush1.msra.mxu0 0.0
  %233 = vmatprep.subr.mxu0 0.0
  %234 = vmatpush1.msra.mxu0 0.0
  %235 = vmatprep.subr.mxu0 0.0
  %236 = vmatpush1.msra.mxu0 0.0
  %237 = vmatprep.subr.mxu0 0.0
  %238 = vmatpush1.msra.mxu0 0.0
  %239 = vmatprep.subr.mxu0 0.0
  %240 = vmatpush1.msra.mxu0 0.0
  %241 = vmatprep.subr.mxu0 0.0
  %242 = vmatpush1.msra.mxu0 0.0
  %243 = vmatprep.subr.mxu0 0.0
  %244 = vmatpush1.msra.mxu0 0.0
  %245 = vmatprep.subr.mxu0 0.0
  %246 = vmatpush1.msra.mxu0 0.0
  %247 = vmatprep.subr.mxu0 0.0
  %248 = vmatpush1.msra.mxu0 0.0
  %249 = vmatprep.subr.mxu0 0.0
  %250 = vmatpush1.msra.mxu0 0.0
  %251 = vmatprep.subr.mxu0 0.0
  %252 = vmatpush1.msra.mxu0 0.0
  %253 = vmatprep.subr.mxu0 0.0
  %254 = vmatpush1.msra.mxu0 0.0
  %255 = vmatprep.subr.mxu0 0.0
  %256 = vmatpush1.msra.mxu0 0.0
  %257 = vmatprep.subr.mxu0 0.0
  %258 = vmatpush1.msra.mxu0 0.0
  %259 = vmatprep.subr.mxu0 0.0
  %260 = vmatpush1.msra.mxu0 0.0
  %261 = vmatprep.subr.mxu0 0.0
  %262 = vmatpush1.msra.mxu0 0.0
  %263 = vmatprep.subr.mxu0 0.0
  %264 = vmatpush1.msra.mxu0 0.0
  %265 = vmatprep.subr.mxu0 0.0
  %266 = vmatpush1.msra.mxu0 0.0
  %267 = vmatprep.mubr.f32.mxu0 0.0
  %268 = vmatmul.mubr.f32.gmra.mrb[0].mxu0 %v192
  %v269 = vpop.f32.mrb[0].mxu0
  %v270 = vadd.f32 %v173, %v269
  %v271 = vpop.f32.mrb[0].mxu0
  %v272 = vadd.f32 %v173, %v271
  %273 = vmatprep.mubr.f32.mxu0 0.0
  %274 = vmatmul.mubr.f32.gmra.mrb[0].mxu0 %v195
  %v275 = vpop.f32.mrb[0].mxu0
  %v276 = vadd.f32 %v178, %v275
  %v277 = vpop.f32.mrb[0].mxu0
  %v278 = vadd.f32 %v178, %v277
  %279 = vmatprep.mubr.f32.mxu0 0.0
  %280 = vmatmul.mubr.f32.gmra.mrb[0].mxu0 %v198
  %v281 = vpop.f32.mrb[0].mxu0
  %v282 = vadd.f32 %v183, %v281
  %v283 = vpop.f32.mrb[0].mxu0
  %v284 = vadd.f32 %v183, %v283
  %285 = vmatprep.mubr.f32.mxu0 0.0
  %286 = vmatmul.mubr.f32.gmra.mrb[0].mxu0 %v201
  %v287 = vpop.f32.mrb[0].mxu0
  %v288 = vadd.f32 %v188, %v287
  %v289 = vpop.f32.mrb[0].mxu0
  %v290 = vadd.f32 %v188, %v289
  %291 = vdwg.mxu0
  %v292 = vmax.f32 %v270, 0.0
  %v293 = vmax.f32 %v272, 0.0
  %v294 = vmax.f32 %v276, 0.0
  %v295 = vmax.f32 %v278, 0.0
  %v296 = vmax.f32 %v282, 0.0
  %v297 = vmax.f32 %v284, 0.0
  %v298 = vmax.f32 %v288, 0.0
  %v299 = vmax.f32 %v290, 0.0
  %301 = vset.pattern.permute.xlu0 0
  %302 = vperm.xlu0 %301, %v161
  %v303 = vpop.permute.xlu0 %302
  %v306 = vsel %vm190, %v160, 0
  %308 = vmatprep.subr.mxu0 %v293
  %309 = vmatpush1.msra.mxu0 %v292
  %310 = vmatprep.subr.mxu0 %v295
  %311 = vmatpush1.msra.mxu0 %v294
  %312 = vmatprep.subr.mxu0 %v297
  %313 = vmatpush1.msra.mxu0 %v296
  %314 = vmatprep.subr.mxu0 %v299
  %315 = vmatpush1.msra.mxu0 %v298
  %316 = vmatprep.subr.mxu0 0.0
  %317 = vmatpush1.msra.mxu0 0.0
  %318 = vmatprep.subr.mxu0 0.0
  %319 = vmatpush1.msra.mxu0 0.0
  %320 = vmatprep.subr.mxu0 0.0
  %321 = vmatpush1.msra.mxu0 0.0
  %322 = vmatprep.subr.mxu0 0.0
  %323 = vmatpush1.msra.mxu0 0.0
  %324 = vmatprep.subr.mxu0 0.0
  %325 = vmatpush1.msra.mxu0 0.0
  %326 = vmatprep.subr.mxu0 0.0
  %327 = vmatpush1.msra.mxu0 0.0
  %328 = vmatprep.subr.mxu0 0.0
  %329 = vmatpush1.msra.mxu0 0.0
  %330 = vmatprep.subr.mxu0 0.0
  %331 = vmatpush1.msra.mxu0 0.0
  %332 = vmatprep.subr.mxu0 0.0
  %333 = vmatpush1.msra.mxu0 0.0
  %334 = vmatprep.subr.mxu0 0.0
  %335 = vmatpush1.msra.mxu0 0.0
  %336 = vmatprep.subr.mxu0 0.0
  %337 = vmatpush1.msra.mxu0 0.0
  %338 = vmatprep.subr.mxu0 0.0
  %339 = vmatpush1.msra.mxu0 0.0
  %340 = vmatprep.subr.mxu0 0.0
  %341 = vmatpush1.msra.mxu0 0.0
  %342 = vmatprep.subr.mxu0 0.0
  %343 = vmatpush1.msra.mxu0 0.0
  %344 = vmatprep.subr.mxu0 0.0
  %345 = vmatpush1.msra.mxu0 0.0
  %346 = vmatprep.subr.mxu0 0.0
  %347 = vmatpush1.msra.mxu0 0.0
  %348 = vmatprep.subr.mxu0 0.0
  %349 = vmatpush1.msra.mxu0 0.0
  %350 = vmatprep.subr.mxu0 0.0
  %351 = vmatpush1.msra.mxu0 0.0
  %352 = vmatprep.subr.mxu0 0.0
  %353 = vmatpush1.msra.mxu0 0.0
  %354 = vmatprep.subr.mxu0 0.0
  %355 = vmatpush1.msra.mxu0 0.0
  %356 = vmatprep.subr.mxu0 0.0
  %357 = vmatpush1.msra.mxu0 0.0
  %358 = vmatprep.subr.mxu0 0.0
  %359 = vmatpush1.msra.mxu0 0.0
  %360 = vmatprep.subr.mxu0 0.0
  %361 = vmatpush1.msra.mxu0 0.0
  %362 = vmatprep.subr.mxu0 0.0
  %363 = vmatpush1.msra.mxu0 0.0
  %364 = vmatprep.subr.mxu0 0.0
  %365 = vmatpush1.msra.mxu0 0.0
  %366 = vmatprep.subr.mxu0 0.0
  %367 = vmatpush1.msra.mxu0 0.0
  %368 = vmatprep.subr.mxu0 0.0
  %369 = vmatpush1.msra.mxu0 0.0
  %370 = vmatprep.subr.mxu0 0.0
  %371 = vmatpush1.msra.mxu0 0.0
  %372 = vmatprep.mubr.f32.mxu0 0.0
  %373 = vmatmul.mubr.f32.gmra.mrb[0].mxu0 %v306
  %v374 = vpop.f32.mrb[0].mxu0
  %v375 = vadd.f32 %v303, %v374
  %v376 = vpop.f32.mrb[0].mxu0
  %v377 = vadd.f32 %v303, %v376
  %378 = vdwg.mxu0
  %v381 = vcombine.low %v375, %v377
  %383 = vst [vmem:[%s7] sm:$0xff] %v381
  %s384 = scalar_lea.vmem %s0, 64
  %v385 = vld [vmem:[%s384] sm:$0xff]
  %v386 = vld [vmem:[%s384 + $0x8] sm:$0xff]
  %v387 = vld [vmem:[%s384 + $0x10] sm:$0xff]
  %v388 = vld [vmem:[%s384 + $0x18] sm:$0xff]
  %v389 = vld [vmem:[%s384 + $0x20] sm:$0xff]
  %v390 = vld [vmem:[%s384 + $0x28] sm:$0xff]
  %v391 = vld [vmem:[%s384 + $0x30] sm:$0xff]
  %v392 = vld [vmem:[%s384 + $0x38] sm:$0xff]
  %393 = vset.pattern.permute.xlu0 1
  %394 = vperm.xlu0 %393, %v138
  %v395 = vpop.permute.xlu0 %394
  %397 = vset.pattern.permute.xlu0 1
  %398 = vperm.xlu0 %397, %v143
  %v399 = vpop.permute.xlu0 %398
  %401 = vset.pattern.permute.xlu0 1
  %402 = vperm.xlu0 %401, %v148
  %v403 = vpop.permute.xlu0 %402
  %405 = vset.pattern.permute.xlu0 1
  %406 = vperm.xlu0 %405, %v153
  %v407 = vpop.permute.xlu0 %406
  %409 = vmatprep.subr.mxu0 %v386
  %410 = vmatpush1.msra.mxu0 %v385
  %411 = vmatprep.subr.mxu0 %v388
  %412 = vmatpush1.msra.mxu0 %v387
  %413 = vmatprep.subr.mxu0 %v390
  %414 = vmatpush1.msra.mxu0 %v389
  %415 = vmatprep.subr.mxu0 %v392
  %416 = vmatpush1.msra.mxu0 %v391
  %417 = vmatprep.subr.mxu0 0.0
  %418 = vmatpush1.msra.mxu0 0.0
  %419 = vmatprep.subr.mxu0 0.0
  %420 = vmatpush1.msra.mxu0 0.0
  %421 = vmatprep.subr.mxu0 0.0
  %422 = vmatpush1.msra.mxu0 0.0
  %423 = vmatprep.subr.mxu0 0.0
  %424 = vmatpush1.msra.mxu0 0.0
  %425 = vmatprep.subr.mxu0 0.0
  %426 = vmatpush1.msra.mxu0 0.0
  %427 = vmatprep.subr.mxu0 0.0
  %428 = vmatpush1.msra.mxu0 0.0
  %429 = vmatprep.subr.mxu0 0.0
  %430 = vmatpush1.msra.mxu0 0.0
  %431 = vmatprep.subr.mxu0 0.0
  %432 = vmatpush1.msra.mxu0 0.0
  %433 = vmatprep.subr.mxu0 0.0
  %434 = vmatpush1.msra.mxu0 0.0
  %435 = vmatprep.subr.mxu0 0.0
  %436 = vmatpush1.msra.mxu0 0.0
  %437 = vmatprep.subr.mxu0 0.0
  %438 = vmatpush1.msra.mxu0 0.0
  %439 = vmatprep.subr.mxu0 0.0
  %440 = vmatpush1.msra.mxu0 0.0
  %441 = vmatprep.subr.mxu0 0.0
  %442 = vmatpush1.msra.mxu0 0.0
  %443 = vmatprep.subr.mxu0 0.0
  %444 = vmatpush1.msra.mxu0 0.0
  %445 = vmatprep.subr.mxu0 0.0
  %446 = vmatpush1.msra.mxu0 0.0
  %447 = vmatprep.subr.mxu0 0.0
  %448 = vmatpush1.msra.mxu0 0.0
  %449 = vmatprep.subr.mxu0 0.0
  %450 = vmatpush1.msra.mxu0 0.0
  %451 = vmatprep.subr.mxu0 0.0
  %452 = vmatpush1.msra.mxu0 0.0
  %453 = vmatprep.subr.mxu0 0.0
  %454 = vmatpush1.msra.mxu0 0.0
  %455 = vmatprep.subr.mxu0 0.0
  %456 = vmatpush1.msra.mxu0 0.0
  %457 = vmatprep.subr.mxu0 0.0
  %458 = vmatpush1.msra.mxu0 0.0
  %459 = vmatprep.subr.mxu0 0.0
  %460 = vmatpush1.msra.mxu0 0.0
  %461 = vmatprep.subr.mxu0 0.0
  %462 = vmatpush1.msra.mxu0 0.0
  %463 = vmatprep.subr.mxu0 0.0
  %464 = vmatpush1.msra.mxu0 0.0
  %465 = vmatprep.subr.mxu0 0.0
  %466 = vmatpush1.msra.mxu0 0.0
  %467 = vmatprep.subr.mxu0 0.0
  %468 = vmatpush1.msra.mxu0 0.0
  %469 = vmatprep.subr.mxu0 0.0
  %470 = vmatpush1.msra.mxu0 0.0
  %471 = vmatprep.subr.mxu0 0.0
  %472 = vmatpush1.msra.mxu0 0.0
  %473 = vmatprep.mubr.f32.mxu0 0.0
  %474 = vmatmul.mubr.f32.gmra.mrb[0].mxu0 %v192
  %v475 = vpop.f32.mrb[0].mxu0
  %v476 = vadd.f32 %v395, %v475
  %v477 = vpop.f32.mrb[0].mxu0
  %v478 = vadd.f32 %v395, %v477
  %479 = vmatprep.mubr.f32.mxu0 0.0
  %480 = vmatmul.mubr.f32.gmra.mrb[0].mxu0 %v195
  %v481 = vpop.f32.mrb[0].mxu0
  %v482 = vadd.f32 %v399, %v481
  %v483 = vpop.f32.mrb[0].mxu0
  %v484 = vadd.f32 %v399, %v483
  %485 = vmatprep.mubr.f32.mxu0 0.0
  %486 = vmatmul.mubr.f32.gmra.mrb[0].mxu0 %v198
  %v487 = vpop.f32.mrb[0].mxu0
  %v488 = vadd.f32 %v403, %v487
  %v489 = vpop.f32.mrb[0].mxu0
  %v490 = vadd.f32 %v403, %v489
  %491 = vmatprep.mubr.f32.mxu0 0.0
  %492 = vmatmul.mubr.f32.gmra.mrb[0].mxu0 %v201
  %v493 = vpop.f32.mrb[0].mxu0
  %v494 = vadd.f32 %v407, %v493
  %v495 = vpop.f32.mrb[0].mxu0
  %v496 = vadd.f32 %v407, %v495
  %497 = vdwg.mxu0
  %v498 = vmax.f32 %v476, 0.0
  %v499 = vmax.f32 %v478, 0.0
  %v500 = vmax.f32 %v482, 0.0
  %v501 = vmax.f32 %v484, 0.0
  %v502 = vmax.f32 %v488, 0.0
  %v503 = vmax.f32 %v490, 0.0
  %v504 = vmax.f32 %v494, 0.0
  %v505 = vmax.f32 %v496, 0.0
  %506 = vmatprep.subr.mxu0 %v499
  %507 = vmatpush1.msra.mxu0 %v498
  %508 = vmatprep.subr.mxu0 %v501
  %509 = vmatpush1.msra.mxu0 %v500
  %510 = vmatprep.subr.mxu0 %v503
  %511 = vmatpush1.msra.mxu0 %v502
  %512 = vmatprep.subr.mxu0 %v505
  %513 = vmatpush1.msra.mxu0 %v504
  %514 = vmatprep.subr.mxu0 0.0
  %515 = vmatpush1.msra.mxu0 0.0
  %516 = vmatprep.subr.mxu0 0.0
  %517 = vmatpush1.msra.mxu0 0.0
  %518 = vmatprep.subr.mxu0 0.0
  %519 = vmatpush1.msra.mxu0 0.0
  %520 = vmatprep.subr.mxu0 0.0
  %521 = vmatpush1.msra.mxu0 0.0
  %522 = vmatprep.subr.mxu0 0.0
  %523 = vmatpush1.msra.mxu0 0.0
  %524 = vmatprep.subr.mxu0 0.0
  %525 = vmatpush1.msra.mxu0 0.0
  %526 = vmatprep.subr.mxu0 0.0
  %527 = vmatpush1.msra.mxu0 0.0
  %528 = vmatprep.subr.mxu0 0.0
  %529 = vmatpush1.msra.mxu0 0.0
  %530 = vmatprep.subr.mxu0 0.0
  %531 = vmatpush1.msra.mxu0 0.0
  %532 = vmatprep.subr.mxu0 0.0
  %533 = vmatpush1.msra.mxu0 0.0
  %534 = vmatprep.subr.mxu0 0.0
  %535 = vmatpush1.msra.mxu0 0.0
  %536 = vmatprep.subr.mxu0 0.0
  %537 = vmatpush1.msra.mxu0 0.0
  %538 = vmatprep.subr.mxu0 0.0
  %539 = vmatpush1.msra.mxu0 0.0
  %540 = vmatprep.subr.mxu0 0.0
  %541 = vmatpush1.msra.mxu0 0.0
  %542 = vmatprep.subr.mxu0 0.0
  %543 = vmatpush1.msra.mxu0 0.0
  %544 = vmatprep.subr.mxu0 0.0
  %545 = vmatpush1.msra.mxu0 0.0
  %546 = vmatprep.subr.mxu0 0.0
  %547 = vmatpush1.msra.mxu0 0.0
  %548 = vmatprep.subr.mxu0 0.0
  %549 = vmatpush1.msra.mxu0 0.0
  %550 = vmatprep.subr.mxu0 0.0
  %551 = vmatpush1.msra.mxu0 0.0
  %552 = vmatprep.subr.mxu0 0.0
  %553 = vmatpush1.msra.mxu0 0.0
  %554 = vmatprep.subr.mxu0 0.0
  %555 = vmatpush1.msra.mxu0 0.0
  %556 = vmatprep.subr.mxu0 0.0
  %557 = vmatpush1.msra.mxu0 0.0
  %558 = vmatprep.subr.mxu0 0.0
  %559 = vmatpush1.msra.mxu0 0.0
  %560 = vmatprep.subr.mxu0 0.0
  %561 = vmatpush1.msra.mxu0 0.0
  %562 = vmatprep.subr.mxu0 0.0
  %563 = vmatpush1.msra.mxu0 0.0
  %564 = vmatprep.subr.mxu0 0.0
  %565 = vmatpush1.msra.mxu0 0.0
  %566 = vmatprep.subr.mxu0 0.0
  %567 = vmatpush1.msra.mxu0 0.0
  %568 = vmatprep.subr.mxu0 0.0
  %569 = vmatpush1.msra.mxu0 0.0
  %570 = vmatprep.mubr.f32.mxu0 0.0
  %571 = vmatmul.mubr.f32.gmra.mrb[0].mxu0 %v306
  %v572 = vpop.f32.mrb[0].mxu0
  %v573 = vadd.f32 %v303, %v572
  %v574 = vpop.f32.mrb[0].mxu0
  %v575 = vadd.f32 %v303, %v574
  %576 = vdwg.mxu0
  %v579 = vcombine.low %v573, %v575
  %s581 = scalar_lea.vmem %s7, 8
  %582 = vst [vmem:[%s581] sm:$0xff] %v579
  // Predicated region
  $region30: #{attention_forward.1} parent=0 // pred_check
    _
  $region31: #{attention_forward.1} parent=0 // pred_check_branch
    %584 = sbr.rel (0) target = $region33
  $region32: #{attention_forward.1} parent=0 // pred_region
    _
  $region33: #{attention_forward.1} parent=0 // pred_fallthru
    _
  // Predicated region
  $region34: #{attention_forward.1} parent=0 // pred_check
    _
  $region35: #{attention_forward.1} parent=0 // pred_check_branch
    %586 = sbr.rel (0) target = $region37
  $region36: #{attention_forward.1} parent=0 // pred_region
    _
  $region37: #{attention_forward.1} parent=0 // pred_fallthru
    _

</llo_original>
